<compile_context>
chip_gen: v7x
topology: tpu7x:2x2x1
jax: 0.10.0
libtpu: 0.0.40
codegen_flags: <defaults>
</compile_context>

<pallas_src>
import functools

import jax
import jax.numpy as jnp
from jax.experimental import pallas as pl
from jax.experimental.pallas import tpu as pltpu

EPS = 1e-5
DEFAULT_TILE_B = 1024  # rows per grid step; multiple of 256 for clean bf16 repack


def _round_up(x, m):
    return ((x + m - 1) // m) * m


# --------------------------------------------------------------------------
# Pass 1: per-tile sum / sum-of-squares of h1 = state @ W1  (BN statistics)
# --------------------------------------------------------------------------
def _make_stats_kernel(batch, tile_b):
    need_mask = (batch % tile_b) != 0  # static: only edge-padded batches

    def stats_kernel(state_ref, w1_ref, stats_ref):
        f1 = w1_ref.shape[1]
        # fcs1 without bias: the bias cancels under the batch-mean subtraction.
        h1 = jnp.dot(state_ref[...].astype(jnp.bfloat16), w1_ref[...],
                     preferred_element_type=jnp.float32)        # [T, F1] f32
        if need_mask:
            rows = (jax.lax.broadcasted_iota(jnp.int32, (tile_b, 1), 0)
                    + pl.program_id(0) * tile_b)
            h1 = jnp.where(rows < batch, h1, 0.0)               # zero pad rows
        s = jnp.sum(h1, axis=0, keepdims=True)                  # [1, F1]
        ss = jnp.sum(h1 * h1, axis=0, keepdims=True)            # [1, F1]
        stats_ref[...] = jnp.concatenate([s, ss], axis=0).reshape(1, 2, f1)

    return stats_kernel


# --------------------------------------------------------------------------
# Pass 2: recompute h1, normalize with full-batch stats, fc2 (+action), fc3
# --------------------------------------------------------------------------
def _make_main_kernel(batch, action_size):
    inv_b = 1.0 / float(batch)

    def main_kernel(state_ref, action_ref, w1_ref, w2s_ref, w2a_ref,
                    vecs_ref, stats_ref, b3_ref, out_ref):
        f1 = w1_ref.shape[1]   # fcs1_units
        f2 = w2s_ref.shape[1]  # fc2_units

        # ---- fcs1 recompute (cheap K = state_size dot; bias dropped) ----
        h1 = jnp.dot(state_ref[...].astype(jnp.bfloat16), w1_ref[...],
                     preferred_element_type=jnp.float32)        # [T, F1]

        # ---- bn1: full-batch stats from the per-tile partials.  The partial
        # reduce is tiny ([n_tiles, 2, F1]) so redoing it per tile is free and
        # keeps the whole forward at exactly two pallas_calls. ----
        tot = jnp.sum(stats_ref[...], axis=0)                   # [2, F1]
        mean = tot[0:1, :] * inv_b
        ex2 = tot[1:2, :] * inv_b
        # E[x^2]-mean^2 (one-sweep form).  Clamp guards the rare cancellation
        # case |mean| >> std; stats are accumulated in f32 throughout.
        var = jnp.maximum(ex2 - mean * mean, 0.0)
        gamma = vecs_ref[0:1, 0:f1]
        beta = vecs_ref[1:2, 0:f1]
        scale = gamma * jax.lax.rsqrt(var + EPS)                # [1, F1]
        shift = beta - mean * scale
        xs = jnp.maximum(h1 * scale + shift, 0.0)               # ReLU

        # ---- fc2 on cat([xs, action], 1): xs half on the MXU ... ----
        h2 = (jnp.dot(xs.astype(jnp.bfloat16), w2s_ref[...],
                      preferred_element_type=jnp.float32)
              + vecs_ref[2:3, 0:f2])                            # + b2
        # ... action half (K = action_size) as unrolled VPU rank-1 updates,
        # f32 math (v5e has no bf16 VPU), overlapping the MXU dot above.
        act = action_ref[...].astype(jnp.float32)
        for k in range(action_size):
            h2 = h2 + act[:, k:k + 1] * w2a_ref[k:k + 1, :]
        h2 = jnp.maximum(h2, 0.0)

        # ---- fc3 (out_features = 1): VPU multiply + lane reduce; an N=1 MXU
        # matmul would waste the systolic array. ----
        w3_row = vecs_ref[3:4, 0:f2]
        q = jnp.sum(h2 * w3_row, axis=-1, keepdims=True) + b3_ref[0]  # [T, 1]
        out_ref[...] = q   # [B,1] output: 4 B/row HBM write, edge tile clipped

    return main_kernel


# --------------------------------------------------------------------------
# Wrapper
# --------------------------------------------------------------------------
@functools.partial(jax.jit, static_argnames=("tile_b",))
def critic_forward(state, action, prepped, tile_b=None):
    """state: [B, state_size], action: [B, action_size] -> [B, 1] float32.

    state/action may be float32 or bfloat16; no wrapper-side astype is added.
    """
    B, S = state.shape
    A = action.shape[1]
    w1, w2s, w2a = prepped["w1t"], prepped["w2t_s"], prepped["w2t_a"]
    vecs, b3 = prepped["vecs"], prepped["b3"]
    F1, F2 = w1.shape[1], w2s.shape[1]

    if tile_b is None:
        tile_b = DEFAULT_TILE_B
    tile_b = _round_up(min(tile_b, B), 8)
    n_tiles = pl.cdiv(B, tile_b)

    # Batch axis is fully independent in both passes (BN stats are per-tile
    # partials), so "parallel" lets v7x's two TensorCores split it; it is a
    # harmless no-op on single-TC v5e/v6e.
    parallel = pltpu.CompilerParams(dimension_semantics=("parallel",))
    pin2 = lambda shape: pl.BlockSpec(shape, lambda i: (0, 0))  # VMEM-resident

    # Pass 1: BN statistics (per-tile sum / sum-of-squares of h1).
    stats = pl.pallas_call(
        _make_stats_kernel(B, tile_b),
        out_shape=jax.ShapeDtypeStruct((n_tiles, 2, F1), jnp.float32),
        grid=(n_tiles,),
        in_specs=[pl.BlockSpec((tile_b, S), lambda i: (i, 0)),
                  pin2((S, F1))],
        out_specs=pl.BlockSpec((1, 2, F1), lambda i: (i, 0, 0)),
        compiler_params=parallel,
    )(state, w1)

    # Pass 2: normalize + fc2 + fc3.
    out = pl.pallas_call(
        _make_main_kernel(B, A),
        out_shape=jax.ShapeDtypeStruct((B, 1), jnp.float32),
        grid=(n_tiles,),
        in_specs=[pl.BlockSpec((tile_b, S), lambda i: (i, 0)),
                  pl.BlockSpec((tile_b, A), lambda i: (i, 0)),
                  pin2((S, F1)),
                  pin2((F1, F2)),
                  pin2((A, F2)),
                  pin2(vecs.shape),
                  pl.BlockSpec((n_tiles, 2, F1), lambda i: (0, 0, 0)),
                  pl.BlockSpec(memory_space=pltpu.MemorySpace.SMEM)],
        out_specs=pl.BlockSpec((tile_b, 1), lambda i: (i, 0)),
        compiler_params=parallel,
    )(state, action, w1, w2s, w2a, vecs, stats, b3)
    return out


# --------------------------------------------------------------------------
# Parameters
# --------------------------------------------------------------------------
def init_params(key, state_size, action_size, fcs1_units=512, fc2_units=256):
    """Deterministic init mirroring CriticNN.__init__/reset_parameters.

    Weights stored pre-transposed [in_features, out_features].  hidden_init
    uses fan_in = weight.size(0) = out_features, exactly as the PyTorch code.
    """
    k1, k2, k3, kb1, kb2, kb3 = jax.random.split(key, 6)

    lim1 = 1.0 / jnp.sqrt(jnp.asarray(fcs1_units, jnp.float32))
    lim2 = 1.0 / jnp.sqrt(jnp.asarray(fc2_units, jnp.float32))

    w1t = jax.random.uniform(k1, (state_size, fcs1_units), jnp.float32, -lim1, lim1)
    w2t = jax.random.uniform(k2, (fcs1_units + action_size, fc2_units), jnp.float32, -lim2, lim2)
    w3t = jax.random.uniform(k3, (fc2_units, 1), jnp.float32, -0.003, 0.003)

    bl1 = 1.0 / jnp.sqrt(jnp.asarray(state_size, jnp.float32))
    bl2 = 1.0 / jnp.sqrt(jnp.asarray(fcs1_units + action_size, jnp.float32))
    bl3 = 1.0 / jnp.sqrt(jnp.asarray(fc2_units, jnp.float32))
    b1 = jax.random.uniform(kb1, (1, fcs1_units), jnp.float32, -bl1, bl1)
    b2 = jax.random.uniform(kb2, (1, fc2_units), jnp.float32, -bl2, bl2)
    b3 = jax.random.uniform(kb3, (1, 1), jnp.float32, -bl3, bl3)

    return {
        "w1t": w1t, "b1": b1,
        "gamma": jnp.ones((1, fcs1_units), jnp.float32),   # BN affine defaults
        "beta": jnp.zeros((1, fcs1_units), jnp.float32),
        "w2t_s": w2t[:fcs1_units, :], "w2t_a": w2t[fcs1_units:, :], "b2": b2,
        "w3t": w3t, "b3": b3,
    }


def prepare_params(p, fcs1_units, fc2_units):
    """One-time packing/casting of module params into the kernel layout."""
    width = max(fcs1_units, fc2_units)
    vecs = jnp.zeros((4, width), jnp.float32)
    vecs = vecs.at[0, :fcs1_units].set(p["gamma"][0])
    vecs = vecs.at[1, :fcs1_units].set(p["beta"][0])
    vecs = vecs.at[2, :fc2_units].set(p["b2"][0])
    vecs = vecs.at[3, :fc2_units].set(p["w3t"][:, 0])
    return {
        "w1t": p["w1t"].astype(jnp.bfloat16),        # b1 intentionally dropped
        "w2t_s": p["w2t_s"].astype(jnp.bfloat16),
        "w2t_a": p["w2t_a"].astype(jnp.float32),     # used on the VPU, keep f32
        "vecs": vecs,
        "b3": p["b3"].reshape(1).astype(jnp.float32),
    }


def critic_reference(state, action, p):
    """Pure-JAX reference of the PyTorch forward (training-mode batchnorm)
    using the same bf16-input / f32-accumulate matmul recipe as the kernel."""
    h1 = jnp.dot(state.astype(jnp.bfloat16), p["w1t"].astype(jnp.bfloat16),
                 preferred_element_type=jnp.float32) + p["b1"]
    mean = jnp.mean(h1, axis=0, keepdims=True)
    var = jnp.mean((h1 - mean) ** 2, axis=0, keepdims=True)
    xs = jnp.maximum((h1 - mean) * jax.lax.rsqrt(var + EPS) * p["gamma"] + p["beta"], 0.0)
    h2 = (jnp.dot(xs.astype(jnp.bfloat16), p["w2t_s"].astype(jnp.bfloat16),
                  preferred_element_type=jnp.float32)
          + action @ p["w2t_a"] + p["b2"])
    h2 = jnp.maximum(h2, 0.0)
    return h2 @ p["w3t"] + p["b3"]


if __name__ == "__main__":
    FCS1, FC2 = 512, 256
    STATE, ACTION = 32, 8

    key = jax.random.PRNGKey(0)
    kp, ks, ka = jax.random.split(key, 3)
    params = init_params(kp, STATE, ACTION, FCS1, FC2)
    prepped = prepare_params(params, FCS1, FC2)

    # Test 1: small batch, single tile (latency/overhead-bound regime).
    B = 8
    state = jax.random.normal(ks, (B, STATE), jnp.float32)
    action = jax.random.uniform(ka, (B, ACTION), jnp.float32, -1.0, 1.0)
    out = jax.block_until_ready(critic_forward(state, action, prepped))
    ref = critic_reference(state, action, params)
    assert out.shape == (B, 1), out.shape
    assert jnp.allclose(out, ref, atol=2e-3, rtol=2e-3), (out, ref)

    # Test 2: multi-tile grid with a ragged last tile (exercises the
    # cross-tile two-pass BatchNorm, pinned-weight reuse and edge masking).
    B2 = 20
    ks2, ka2 = jax.random.split(jax.random.PRNGKey(1))
    state2 = jax.random.normal(ks2, (B2, STATE), jnp.float32)
    action2 = jax.random.uniform(ka2, (B2, ACTION), jnp.float32, -1.0, 1.0)
    out2 = jax.block_until_ready(critic_forward(state2, action2, prepped, tile_b=8))
    ref2 = critic_reference(state2, action2, params)
    assert out2.shape == (B2, 1), out2.shape
    assert jnp.allclose(out2, ref2, atol=2e-3, rtol=2e-3), (out2, ref2)

    print("KERNEL_OK")
</pallas_src>

<mosaic_0001>
module attributes {stable_mosaic.version = 11 : i64} {
  func.func @main_kernel(%arg0: i32, %arg1: memref<8x32xf32, #tpu.memory_space<vmem>>, %arg2: memref<8x8xf32, #tpu.memory_space<vmem>>, %arg3: memref<32x512xbf16, #tpu.memory_space<vmem>>, %arg4: memref<512x256xbf16, #tpu.memory_space<vmem>>, %arg5: memref<8x256xf32, #tpu.memory_space<vmem>>, %arg6: memref<4x512xf32, #tpu.memory_space<vmem>>, %arg7: memref<1x2x512xf32, #tpu.memory_space<vmem>>, %arg8: memref<1xf32, #tpu.memory_space<smem>>, %arg9: memref<8x1xf32, #tpu.memory_space<vmem>>) attributes {dimension_semantics = [#tpu.dimension_semantics<parallel>], iteration_bounds = array<i64: 1>, scalar_prefetch = 0 : i64, scratch_operands = 0 : i64, tpu.core_type = #tpu.core_type<tc>, window_params = [{transform_indices = @transform_0, window_bounds = array<i64: 8, 32>}, {transform_indices = @transform_1, window_bounds = array<i64: 8, 8>}, {pipeline_mode = #tpu.pipeline_mode<synchronous>, transform_indices = @transform_2, window_bounds = array<i64: 32, 512>}, {pipeline_mode = #tpu.pipeline_mode<synchronous>, transform_indices = @transform_3, window_bounds = array<i64: 512, 256>}, {pipeline_mode = #tpu.pipeline_mode<synchronous>, transform_indices = @transform_4, window_bounds = array<i64: 8, 256>}, {pipeline_mode = #tpu.pipeline_mode<synchronous>, transform_indices = @transform_5, window_bounds = array<i64: 4, 512>}, {pipeline_mode = #tpu.pipeline_mode<synchronous>, transform_indices = @transform_6, window_bounds = array<i64: 1, 2, 512>}, {transform_indices = @transform_7, window_bounds = array<i64: 1>}, {transform_indices = @transform_8, window_bounds = array<i64: 8, 1>}]} {
    %c0 = arith.constant 0 : index
    %c0_0 = arith.constant 0 : index
    %0 = vector.load %arg1[%c0, %c0_0] : memref<8x32xf32, #tpu.memory_space<vmem>>, vector<8x32xf32>
    %1 = arith.truncf %0 : vector<8x32xf32> to vector<8x32xbf16>
    %c0_1 = arith.constant 0 : index
    %c0_2 = arith.constant 0 : index
    %2 = vector.load %arg3[%c0_1, %c0_2] : memref<32x512xbf16, #tpu.memory_space<vmem>>, vector<32x512xbf16>
    %cst = arith.constant dense<0.000000e+00> : vector<8x512xf32>
    %3 = tpu.matmul %1, %2, %cst {dimension_numbers = #tpu.dot_dimension_numbers<[1], [0], [0], [1], [0, 0, 1, 1], [], []>} : vector<8x32xbf16>, vector<32x512xbf16>, vector<8x512xf32> -> vector<8x512xf32>
    %c0_3 = arith.constant 0 : index
    %c0_4 = arith.constant 0 : index
    %c0_5 = arith.constant 0 : index
    %4 = vector.load %arg7[%c0_3, %c0_4, %c0_5] : memref<1x2x512xf32, #tpu.memory_space<vmem>>, vector<1x2x512xf32>
    %cst_6 = arith.constant dense<0.000000e+00> : vector<2x512xf32>
    %5 = vector.multi_reduction <add>, %4, %cst_6 [0] : vector<1x2x512xf32> to vector<2x512xf32>
    %6 = vector.extract_strided_slice %5 {offsets = [0, 0], sizes = [1, 512], strides = [1, 1]} : vector<2x512xf32> to vector<1x512xf32>
    %cst_7 = arith.constant 1.250000e-01 : f32
    %7 = vector.broadcast %cst_7 : f32 to vector<1x512xf32>
    %8 = arith.mulf %6, %7 : vector<1x512xf32>
    %9 = vector.extract_strided_slice %5 {offsets = [1, 0], sizes = [1, 512], strides = [1, 1]} : vector<2x512xf32> to vector<1x512xf32>
    %cst_8 = arith.constant 1.250000e-01 : f32
    %10 = vector.broadcast %cst_8 : f32 to vector<1x512xf32>
    %11 = arith.mulf %9, %10 : vector<1x512xf32>
    %12 = arith.mulf %8, %8 : vector<1x512xf32>
    %13 = arith.subf %11, %12 : vector<1x512xf32>
    %cst_9 = arith.constant 0.000000e+00 : f32
    %14 = vector.broadcast %cst_9 : f32 to vector<1x512xf32>
    %15 = arith.maximumf %13, %14 : vector<1x512xf32>
    %c0_10 = arith.constant 0 : index
    %c0_11 = arith.constant 0 : index
    %16 = vector.load %arg6[%c0_10, %c0_11] : memref<4x512xf32, #tpu.memory_space<vmem>>, vector<1x512xf32>
    %c1 = arith.constant 1 : index
    %c0_12 = arith.constant 0 : index
    %17 = vector.load %arg6[%c1, %c0_12] : memref<4x512xf32, #tpu.memory_space<vmem>>, vector<1x512xf32>
    %cst_13 = arith.constant 9.99999974E-6 : f32
    %18 = vector.broadcast %cst_13 : f32 to vector<1x512xf32>
    %19 = arith.addf %15, %18 : vector<1x512xf32>
    %20 = math.rsqrt %19 : vector<1x512xf32>
    %21 = arith.mulf %16, %20 : vector<1x512xf32>
    %22 = arith.mulf %8, %21 : vector<1x512xf32>
    %23 = arith.subf %17, %22 : vector<1x512xf32>
    %24 = vector.broadcast %21 : vector<1x512xf32> to vector<8x512xf32>
    %25 = arith.mulf %3, %24 : vector<8x512xf32>
    %26 = vector.broadcast %23 : vector<1x512xf32> to vector<8x512xf32>
    %27 = arith.addf %25, %26 : vector<8x512xf32>
    %cst_14 = arith.constant 0.000000e+00 : f32
    %28 = vector.broadcast %cst_14 : f32 to vector<8x512xf32>
    %29 = arith.maximumf %27, %28 : vector<8x512xf32>
    %30 = arith.truncf %29 : vector<8x512xf32> to vector<8x512xbf16>
    %c0_15 = arith.constant 0 : index
    %c0_16 = arith.constant 0 : index
    %31 = vector.load %arg4[%c0_15, %c0_16] : memref<512x256xbf16, #tpu.memory_space<vmem>>, vector<512x256xbf16>
    %cst_17 = arith.constant dense<0.000000e+00> : vector<8x256xf32>
    %32 = tpu.matmul %30, %31, %cst_17 {dimension_numbers = #tpu.dot_dimension_numbers<[1], [0], [0], [1], [0, 0, 1, 1], [], []>} : vector<8x512xbf16>, vector<512x256xbf16>, vector<8x256xf32> -> vector<8x256xf32>
    %c2 = arith.constant 2 : index
    %c0_18 = arith.constant 0 : index
    %33 = vector.load %arg6[%c2, %c0_18] : memref<4x512xf32, #tpu.memory_space<vmem>>, vector<1x256xf32>
    %34 = vector.broadcast %33 : vector<1x256xf32> to vector<8x256xf32>
    %35 = arith.addf %32, %34 : vector<8x256xf32>
    %c0_19 = arith.constant 0 : index
    %c0_20 = arith.constant 0 : index
    %36 = vector.load %arg2[%c0_19, %c0_20] : memref<8x8xf32, #tpu.memory_space<vmem>>, vector<8x8xf32>
    %37 = vector.extract_strided_slice %36 {offsets = [0, 0], sizes = [8, 1], strides = [1, 1]} : vector<8x8xf32> to vector<8x1xf32>
    %c0_21 = arith.constant 0 : index
    %c0_22 = arith.constant 0 : index
    %38 = vector.load %arg5[%c0_21, %c0_22] : memref<8x256xf32, #tpu.memory_space<vmem>>, vector<1x256xf32>
    %39 = vector.broadcast %37 : vector<8x1xf32> to vector<8x256xf32>
    %40 = vector.broadcast %38 : vector<1x256xf32> to vector<8x256xf32>
    %41 = arith.mulf %39, %40 : vector<8x256xf32>
    %42 = arith.addf %35, %41 : vector<8x256xf32>
    %43 = vector.extract_strided_slice %36 {offsets = [0, 1], sizes = [8, 1], strides = [1, 1]} : vector<8x8xf32> to vector<8x1xf32>
    %c1_23 = arith.constant 1 : index
    %c0_24 = arith.constant 0 : index
    %44 = vector.load %arg5[%c1_23, %c0_24] : memref<8x256xf32, #tpu.memory_space<vmem>>, vector<1x256xf32>
    %45 = vector.broadcast %43 : vector<8x1xf32> to vector<8x256xf32>
    %46 = vector.broadcast %44 : vector<1x256xf32> to vector<8x256xf32>
    %47 = arith.mulf %45, %46 : vector<8x256xf32>
    %48 = arith.addf %42, %47 : vector<8x256xf32>
    %49 = vector.extract_strided_slice %36 {offsets = [0, 2], sizes = [8, 1], strides = [1, 1]} : vector<8x8xf32> to vector<8x1xf32>
    %c2_25 = arith.constant 2 : index
    %c0_26 = arith.constant 0 : index
    %50 = vector.load %arg5[%c2_25, %c0_26] : memref<8x256xf32, #tpu.memory_space<vmem>>, vector<1x256xf32>
    %51 = vector.broadcast %49 : vector<8x1xf32> to vector<8x256xf32>
    %52 = vector.broadcast %50 : vector<1x256xf32> to vector<8x256xf32>
    %53 = arith.mulf %51, %52 : vector<8x256xf32>
    %54 = arith.addf %48, %53 : vector<8x256xf32>
    %55 = vector.extract_strided_slice %36 {offsets = [0, 3], sizes = [8, 1], strides = [1, 1]} : vector<8x8xf32> to vector<8x1xf32>
    %c3 = arith.constant 3 : index
    %c0_27 = arith.constant 0 : index
    %56 = vector.load %arg5[%c3, %c0_27] : memref<8x256xf32, #tpu.memory_space<vmem>>, vector<1x256xf32>
    %57 = vector.broadcast %55 : vector<8x1xf32> to vector<8x256xf32>
    %58 = vector.broadcast %56 : vector<1x256xf32> to vector<8x256xf32>
    %59 = arith.mulf %57, %58 : vector<8x256xf32>
    %60 = arith.addf %54, %59 : vector<8x256xf32>
    %61 = vector.extract_strided_slice %36 {offsets = [0, 4], sizes = [8, 1], strides = [1, 1]} : vector<8x8xf32> to vector<8x1xf32>
    %c4 = arith.constant 4 : index
    %c0_28 = arith.constant 0 : index
    %62 = vector.load %arg5[%c4, %c0_28] : memref<8x256xf32, #tpu.memory_space<vmem>>, vector<1x256xf32>
    %63 = vector.broadcast %61 : vector<8x1xf32> to vector<8x256xf32>
    %64 = vector.broadcast %62 : vector<1x256xf32> to vector<8x256xf32>
    %65 = arith.mulf %63, %64 : vector<8x256xf32>
    %66 = arith.addf %60, %65 : vector<8x256xf32>
    %67 = vector.extract_strided_slice %36 {offsets = [0, 5], sizes = [8, 1], strides = [1, 1]} : vector<8x8xf32> to vector<8x1xf32>
    %c5 = arith.constant 5 : index
    %c0_29 = arith.constant 0 : index
    %68 = vector.load %arg5[%c5, %c0_29] : memref<8x256xf32, #tpu.memory_space<vmem>>, vector<1x256xf32>
    %69 = vector.broadcast %67 : vector<8x1xf32> to vector<8x256xf32>
    %70 = vector.broadcast %68 : vector<1x256xf32> to vector<8x256xf32>
    %71 = arith.mulf %69, %70 : vector<8x256xf32>
    %72 = arith.addf %66, %71 : vector<8x256xf32>
    %73 = vector.extract_strided_slice %36 {offsets = [0, 6], sizes = [8, 1], strides = [1, 1]} : vector<8x8xf32> to vector<8x1xf32>
    %c6 = arith.constant 6 : index
    %c0_30 = arith.constant 0 : index
    %74 = vector.load %arg5[%c6, %c0_30] : memref<8x256xf32, #tpu.memory_space<vmem>>, vector<1x256xf32>
    %75 = vector.broadcast %73 : vector<8x1xf32> to vector<8x256xf32>
    %76 = vector.broadcast %74 : vector<1x256xf32> to vector<8x256xf32>
    %77 = arith.mulf %75, %76 : vector<8x256xf32>
    %78 = arith.addf %72, %77 : vector<8x256xf32>
    %79 = vector.extract_strided_slice %36 {offsets = [0, 7], sizes = [8, 1], strides = [1, 1]} : vector<8x8xf32> to vector<8x1xf32>
    %c7 = arith.constant 7 : index
    %c0_31 = arith.constant 0 : index
    %80 = vector.load %arg5[%c7, %c0_31] : memref<8x256xf32, #tpu.memory_space<vmem>>, vector<1x256xf32>
    %81 = vector.broadcast %79 : vector<8x1xf32> to vector<8x256xf32>
    %82 = vector.broadcast %80 : vector<1x256xf32> to vector<8x256xf32>
    %83 = arith.mulf %81, %82 : vector<8x256xf32>
    %84 = arith.addf %78, %83 : vector<8x256xf32>
    %cst_32 = arith.constant 0.000000e+00 : f32
    %85 = vector.broadcast %cst_32 : f32 to vector<8x256xf32>
    %86 = arith.maximumf %84, %85 : vector<8x256xf32>
    %c3_33 = arith.constant 3 : index
    %c0_34 = arith.constant 0 : index
    %87 = vector.load %arg6[%c3_33, %c0_34] : memref<4x512xf32, #tpu.memory_space<vmem>>, vector<1x256xf32>
    %88 = vector.broadcast %87 : vector<1x256xf32> to vector<8x256xf32>
    %89 = arith.mulf %86, %88 : vector<8x256xf32>
    %cst_35 = arith.constant dense<0.000000e+00> : vector<8xf32>
    %90 = vector.multi_reduction <add>, %89, %cst_35 [1] : vector<8x256xf32> to vector<8xf32>
    %91 = vector.shape_cast %90 : vector<8xf32> to vector<8x1xf32>
    %c0_36 = arith.constant 0 : index
    %92 = memref.load %arg8[%c0_36] : memref<1xf32, #tpu.memory_space<smem>>
    %93 = vector.broadcast %92 : f32 to vector<8x1xf32>
    %94 = arith.addf %91, %93 : vector<8x1xf32>
    %c0_37 = arith.constant 0 : index
    %c0_38 = arith.constant 0 : index
    %95 = vector.load %arg9[%c0_37, %c0_38] : memref<8x1xf32, #tpu.memory_space<vmem>>, vector<8x1xf32>
    tpu.vector_store %arg9[%c0_37, %c0_38], %94 {strides = array<i32>} : memref<8x1xf32, #tpu.memory_space<vmem>>, vector<8x1xf32>,
    return
  }
  func.func @transform_0(%arg0: i32) -> (i32, i32) {
    %c0_i32 = arith.constant 0 : i32
    %c0_i32_0 = arith.constant 0 : i32
    return %arg0, %c0_i32 : i32, i32
  }
  func.func @transform_1(%arg0: i32) -> (i32, i32) {
    %c0_i32 = arith.constant 0 : i32
    %c0_i32_0 = arith.constant 0 : i32
    return %arg0, %c0_i32 : i32, i32
  }
  func.func @transform_2(%arg0: i32) -> (i32, i32) {
    %c0_i32 = arith.constant 0 : i32
    %c0_i32_0 = arith.constant 0 : i32
    %c0_i32_1 = arith.constant 0 : i32
    return %c0_i32, %c0_i32_0 : i32, i32
  }
  func.func @transform_3(%arg0: i32) -> (i32, i32) {
    %c0_i32 = arith.constant 0 : i32
    %c0_i32_0 = arith.constant 0 : i32
    %c0_i32_1 = arith.constant 0 : i32
    return %c0_i32, %c0_i32_0 : i32, i32
  }
  func.func @transform_4(%arg0: i32) -> (i32, i32) {
    %c0_i32 = arith.constant 0 : i32
    %c0_i32_0 = arith.constant 0 : i32
    %c0_i32_1 = arith.constant 0 : i32
    return %c0_i32, %c0_i32_0 : i32, i32
  }
  func.func @transform_5(%arg0: i32) -> (i32, i32) {
    %c0_i32 = arith.constant 0 : i32
    %c0_i32_0 = arith.constant 0 : i32
    %c0_i32_1 = arith.constant 0 : i32
    return %c0_i32, %c0_i32_0 : i32, i32
  }
  func.func @transform_6(%arg0: i32) -> (i32, i32, i32) {
    %c0_i32 = arith.constant 0 : i32
    %c0_i32_0 = arith.constant 0 : i32
    %c0_i32_1 = arith.constant 0 : i32
    %c0_i32_2 = arith.constant 0 : i32
    return %c0_i32, %c0_i32_0, %c0_i32_1 : i32, i32, i32
  }
  func.func @transform_7(%arg0: i32) -> i32 {
    %c0_i32 = arith.constant 0 : i32
    %c0_i32_0 = arith.constant 0 : i32
    return %c0_i32 : i32
  }
  func.func @transform_8(%arg0: i32) -> (i32, i32) {
    %c0_i32 = arith.constant 0 : i32
    %c0_i32_0 = arith.constant 0 : i32
    return %arg0, %c0_i32 : i32, i32
  }
}

module attributes {stable_mosaic.version = 11 : i64} {
  func.func @stats_kernel(%arg0: i32, %arg1: memref<8x32xf32, #tpu.memory_space<vmem>>, %arg2: memref<32x512xbf16, #tpu.memory_space<vmem>>, %arg3: memref<1x2x512xf32, #tpu.memory_space<vmem>>) attributes {dimension_semantics = [#tpu.dimension_semantics<parallel>], iteration_bounds = array<i64: 1>, scalar_prefetch = 0 : i64, scratch_operands = 0 : i64, tpu.core_type = #tpu.core_type<tc>, window_params = [{transform_indices = @transform_0, window_bounds = array<i64: 8, 32>}, {pipeline_mode = #tpu.pipeline_mode<synchronous>, transform_indices = @transform_1, window_bounds = array<i64: 32, 512>}, {transform_indices = @transform_2, window_bounds = array<i64: 1, 2, 512>}]} {
    %c0 = arith.constant 0 : index
    %c0_0 = arith.constant 0 : index
    %0 = vector.load %arg1[%c0, %c0_0] : memref<8x32xf32, #tpu.memory_space<vmem>>, vector<8x32xf32>
    %1 = arith.truncf %0 : vector<8x32xf32> to vector<8x32xbf16>
    %c0_1 = arith.constant 0 : index
    %c0_2 = arith.constant 0 : index
    %2 = vector.load %arg2[%c0_1, %c0_2] : memref<32x512xbf16, #tpu.memory_space<vmem>>, vector<32x512xbf16>
    %cst = arith.constant dense<0.000000e+00> : vector<8x512xf32>
    %3 = tpu.matmul %1, %2, %cst {dimension_numbers = #tpu.dot_dimension_numbers<[1], [0], [0], [1], [0, 0, 1, 1], [], []>} : vector<8x32xbf16>, vector<32x512xbf16>, vector<8x512xf32> -> vector<8x512xf32>
    %cst_3 = arith.constant dense<0.000000e+00> : vector<512xf32>
    %4 = vector.multi_reduction <add>, %3, %cst_3 [0] : vector<8x512xf32> to vector<512xf32>
    %5 = vector.shape_cast %4 : vector<512xf32> to vector<1x512xf32>
    %6 = arith.mulf %3, %3 : vector<8x512xf32>
    %cst_4 = arith.constant dense<0.000000e+00> : vector<512xf32>
    %7 = vector.multi_reduction <add>, %6, %cst_4 [0] : vector<8x512xf32> to vector<512xf32>
    %8 = vector.shape_cast %7 : vector<512xf32> to vector<1x512xf32>
    %9 = tpu.concatenate %5, %8 in 0 : vector<1x512xf32>, vector<1x512xf32> -> vector<2x512xf32>
    %10 = vector.shape_cast %9 : vector<2x512xf32> to vector<1x2x512xf32>
    %c0_5 = arith.constant 0 : index
    %c0_6 = arith.constant 0 : index
    %c0_7 = arith.constant 0 : index
    %11 = vector.load %arg3[%c0_5, %c0_6, %c0_7] : memref<1x2x512xf32, #tpu.memory_space<vmem>>, vector<1x2x512xf32>
    tpu.vector_store %arg3[%c0_5, %c0_6, %c0_7], %10 {strides = array<i32>} : memref<1x2x512xf32, #tpu.memory_space<vmem>>, vector<1x2x512xf32>,
    return
  }
  func.func @transform_0(%arg0: i32) -> (i32, i32) {
    %c0_i32 = arith.constant 0 : i32
    %c0_i32_0 = arith.constant 0 : i32
    return %arg0, %c0_i32 : i32, i32
  }
  func.func @transform_1(%arg0: i32) -> (i32, i32) {
    %c0_i32 = arith.constant 0 : i32
    %c0_i32_0 = arith.constant 0 : i32
    %c0_i32_1 = arith.constant 0 : i32
    return %c0_i32, %c0_i32_0 : i32, i32
  }
  func.func @transform_2(%arg0: i32) -> (i32, i32, i32) {
    %c0_i32 = arith.constant 0 : i32
    %c0_i32_0 = arith.constant 0 : i32
    %c0_i32_1 = arith.constant 0 : i32
    return %arg0, %c0_i32, %c0_i32_0 : i32, i32, i32
  }
}

</mosaic_0001>

<llo_original>
// kernel: critic_forward.2
$region0: #{critic_forward.2}
  #allocation0 [shape = 'u32[]', space=smem, size = 0x4, offset = 0x4, fixed_abs, tag = 'smem constant byte address 0x4 - core index']
  #allocation1 [shape = 'u32[144,128]{1,0:T(1,128)}', space=vmem, size = 0x12000, scoped, tag = 'internal scratch']
  %s0 = inlined_call_operand.hbm [shape: f32[8,32], index: 0, kind: input, shape index: {}]
  %s1 = inlined_call_operand.hbm [shape: bf16[32,512], index: 1, kind: input, shape index: {}]
  %s2 = inlined_call_operand.vmem [shape: f32[1,2,512], index: 2, kind: output, shape index: {}]
  %s3 = sld [smem:[#allocation0]]
  $region26: #{critic_forward.2} parent=0
    _
  %s5 = ssub.s32 1, %s3
  %s6 = scalar_select 0, %s5, %s3
  $region1: #{critic_forward.2} parent=0
    #allocation2 [shape = 'u8[4096]{0}', space=vmem, size = 0x1000, scoped, tag = 'input window, operand 0, single buffered']
    #allocation3 [shape = 's32[1]{0}', space=sflag, size = 0x4, scoped, tag = 'scoped memory for critic_forward.2']
    #allocation4 [shape = 'u8[32768]{0}', space=vmem, size = 0x8000, scoped, tag = 'input window, operand 1, single buffered']
    #allocation5 [shape = 's32[1]{0}', space=sflag, size = 0x4, scoped, tag = 'scoped memory for critic_forward.2']
    %7 = vsyncpa [#allocation3], 0
    %8 = vsyncpa [#allocation5], 0
    // Predicated region
    $region2: #{critic_forward.2} parent=1 // pred_check
      _
    $region3: #{critic_forward.2} parent=1 // pred_check_branch
      %10 = sbr.rel (0) target = $region5
    $region4: #{critic_forward.2} parent=1 // pred_region
      %s12 = ssub.s32 128, 128
      %13 = vsyncadd [#allocation3], %s12
      %s15 = sshll.u32 [#allocation2], 4
      %s16 = int_to_ptr.vmem [resolvable:$true] %s15
      %18 = dma.hbm_to_vmem [thread:$0]  %s0, 128, %s16, [#allocation3]
    $region5: #{critic_forward.2} parent=1 // pred_fallthru
      _
    // Predicated region
    $region6: #{critic_forward.2} parent=1 // pred_check
      _
    $region7: #{critic_forward.2} parent=1 // pred_check_branch
      %20 = sbr.rel (0) target = $region9
    $region8: #{critic_forward.2} parent=1 // pred_region
      %s22 = ssub.s32 1024, 1024
      %23 = vsyncadd [#allocation5], %s22
      %s24 = sshll.u32 [#allocation4], 4
      %s25 = int_to_ptr.vmem [resolvable:$true] %s24
      %30 = dma.hbm_to_vmem [thread:$0]  %s1, 1024, %s25, [#allocation5], 256, 256, 16
    $region9: #{critic_forward.2} parent=1 // pred_fallthru
      _
    // Predicated region
    $region10: #{critic_forward.2} parent=1 // pred_check
      _
    $region11: #{critic_forward.2} parent=1 // pred_check_branch
      %32 = sbr.rel (0) target = $region13
    $region12: #{critic_forward.2} parent=1 // pred_region
      %33 = dma.done [#allocation3], 128
    $region13: #{critic_forward.2} parent=1 // pred_fallthru
      _
    // Predicated region
    $region14: #{critic_forward.2} parent=1 // pred_check
      _
    $region15: #{critic_forward.2} parent=1 // pred_check_branch
      %35 = sbr.rel (0) target = $region17
    $region16: #{critic_forward.2} parent=1 // pred_region
      %36 = dma.done [#allocation5], 1024
    $region17: #{critic_forward.2} parent=1 // pred_fallthru
      _
    %v38 = vld [vmem:[#allocation2] sm:$0xff]
    %v39 = vpack.c.bf16 %v38, %v38
    %v40 = vld [vmem:[#allocation4] sm:$0xff]
    %v41 = vld [vmem:[#allocation4 + $0x8] sm:$0xff]
    %v42 = vld [vmem:[#allocation4 + $0x10] sm:$0xff]
    %v43 = vld [vmem:[#allocation4 + $0x18] sm:$0xff]
    %v44 = vld [vmem:[#allocation4 + $0x20] sm:$0xff]
    %v45 = vld [vmem:[#allocation4 + $0x28] sm:$0xff]
    %v46 = vld [vmem:[#allocation4 + $0x30] sm:$0xff]
    %v47 = vld [vmem:[#allocation4 + $0x38] sm:$0xff]
    %v56 = vunpack.c.l.b16 %v40
    %v57 = vunpack.c.h.b16 %v40
    %v58 = vunpack.c.l.b16 %v41
    %v59 = vunpack.c.h.b16 %v41
    %v60 = vunpack.c.l.b16 %v42
    %v61 = vunpack.c.h.b16 %v42
    %v62 = vunpack.c.l.b16 %v43
    %v63 = vunpack.c.h.b16 %v43
    %v64 = vunpack.c.l.b16 %v44
    %v65 = vunpack.c.h.b16 %v44
    %v66 = vunpack.c.l.b16 %v45
    %v67 = vunpack.c.h.b16 %v45
    %v68 = vunpack.c.l.b16 %v46
    %v69 = vunpack.c.h.b16 %v46
    %v70 = vunpack.c.l.b16 %v47
    %v71 = vunpack.c.h.b16 %v47
    %v72 = vpack.c.b16 %v60, %v56
    %v73 = vpack.c.b16 %v61, %v57
    %v74 = vpack.c.b16 %v62, %v58
    %v75 = vpack.c.b16 %v63, %v59
    %v76 = vpack.c.b16 %v68, %v64
    %v77 = vpack.c.b16 %v69, %v65
    %v78 = vpack.c.b16 %v70, %v66
    %v79 = vpack.c.b16 %v71, %v67
    %vm88 = vcmask 261120
    %v90 = vsel %vm88, %v39, 0
    %92 = vmatprep.subr.bf16.mxu0 %v73
    %93 = vmatpush1.bf16.msra.mxu0 %v72
    %94 = vmatprep.subr.bf16.mxu0 %v77
    %95 = vmatpush1.bf16.msra.mxu0 %v76
    %96 = vmatprep.subr.bf16.mxu0 0
    %97 = vmatpush1.bf16.msra.mxu0 0
    %98 = vmatprep.subr.bf16.mxu0 0
    %99 = vmatpush1.bf16.msra.mxu0 0
    %100 = vmatprep.subr.bf16.mxu0 0
    %101 = vmatpush1.bf16.msra.mxu0 0
    %102 = vmatprep.subr.bf16.mxu0 0
    %103 = vmatpush1.bf16.msra.mxu0 0
    %104 = vmatprep.subr.bf16.mxu0 0
    %105 = vmatpush1.bf16.msra.mxu0 0
    %106 = vmatprep.subr.bf16.mxu0 0
    %107 = vmatpush1.bf16.msra.mxu0 0
    %108 = vmatprep.subr.bf16.mxu0 0
    %109 = vmatpush1.bf16.msra.mxu0 0
    %110 = vmatprep.subr.bf16.mxu0 0
    %111 = vmatpush1.bf16.msra.mxu0 0
    %112 = vmatprep.subr.bf16.mxu0 0
    %113 = vmatpush1.bf16.msra.mxu0 0
    %114 = vmatprep.subr.bf16.mxu0 0
    %115 = vmatpush1.bf16.msra.mxu0 0
    %116 = vmatprep.subr.bf16.mxu0 0
    %117 = vmatpush1.bf16.msra.mxu0 0
    %118 = vmatprep.subr.bf16.mxu0 0
    %119 = vmatpush1.bf16.msra.mxu0 0
    %120 = vmatprep.subr.bf16.mxu0 0
    %121 = vmatpush1.bf16.msra.mxu0 0
    %122 = vmatprep.subr.bf16.mxu0 0
    %123 = vmatpush1.bf16.msra.mxu0 0
    %124 = vmatprep.mubr.bf16.mxu0 0
    %125 = vmatmul.mubr.bf16.gmra.mrb[0].mxu0 %v90
    %v126 = vpop.f32.mrb[0].mxu0
    %v127 = vadd.f32 0.0, %v126
    %v128 = vpop.f32.mrb[0].mxu0
    %v129 = vadd.f32 0.0, %v128
    %v130 = vpop.f32.mrb[0].mxu0
    %v131 = vpop.f32.mrb[0].mxu0
    %132 = vdwg.mxu0
    %133 = vmatprep.subr.bf16.mxu0 %v75
    %134 = vmatpush1.bf16.msra.mxu0 %v74
    %135 = vmatprep.subr.bf16.mxu0 %v79
    %136 = vmatpush1.bf16.msra.mxu0 %v78
    %137 = vmatprep.subr.bf16.mxu0 0
    %138 = vmatpush1.bf16.msra.mxu0 0
    %139 = vmatprep.subr.bf16.mxu0 0
    %140 = vmatpush1.bf16.msra.mxu0 0
    %141 = vmatprep.subr.bf16.mxu0 0
    %142 = vmatpush1.bf16.msra.mxu0 0
    %143 = vmatprep.subr.bf16.mxu0 0
    %144 = vmatpush1.bf16.msra.mxu0 0
    %145 = vmatprep.subr.bf16.mxu0 0
    %146 = vmatpush1.bf16.msra.mxu0 0
    %147 = vmatprep.subr.bf16.mxu0 0
    %148 = vmatpush1.bf16.msra.mxu0 0
    %149 = vmatprep.subr.bf16.mxu0 0
    %150 = vmatpush1.bf16.msra.mxu0 0
    %151 = vmatprep.subr.bf16.mxu0 0
    %152 = vmatpush1.bf16.msra.mxu0 0
    %153 = vmatprep.subr.bf16.mxu0 0
    %154 = vmatpush1.bf16.msra.mxu0 0
    %155 = vmatprep.subr.bf16.mxu0 0
    %156 = vmatpush1.bf16.msra.mxu0 0
    %157 = vmatprep.subr.bf16.mxu0 0
    %158 = vmatpush1.bf16.msra.mxu0 0
    %159 = vmatprep.subr.bf16.mxu0 0
    %160 = vmatpush1.bf16.msra.mxu0 0
    %161 = vmatprep.subr.bf16.mxu0 0
    %162 = vmatpush1.bf16.msra.mxu0 0
    %163 = vmatprep.subr.bf16.mxu0 0
    %164 = vmatpush1.bf16.msra.mxu0 0
    %165 = vmatprep.mubr.bf16.mxu0 0
    %166 = vmatmul.mubr.bf16.gmra.mrb[0].mxu0 %v90
    %v167 = vpop.f32.mrb[0].mxu0
    %v168 = vadd.f32 0.0, %v167
    %v169 = vpop.f32.mrb[0].mxu0
    %v170 = vadd.f32 0.0, %v169
    %v171 = vpop.f32.mrb[0].mxu0
    %v172 = vpop.f32.mrb[0].mxu0
    %173 = vdwg.mxu0
    %v174 = vrot.slane %v127, 4
    %v175 = vadd.f32 %v127, %v174
    %v176 = vrot.slane %v175, 2
    %v177 = vadd.f32 %v175, %v176
    %v178 = vrot.slane %v177, 1
    %v179 = vadd.f32 %v177, %v178
    %v180 = vrot.slane %v129, 4
    %v181 = vadd.f32 %v129, %v180
    %v182 = vrot.slane %v181, 2
    %v183 = vadd.f32 %v181, %v182
    %v184 = vrot.slane %v183, 1
    %v185 = vadd.f32 %v183, %v184
    %v186 = vrot.slane %v168, 4
    %v187 = vadd.f32 %v168, %v186
    %v188 = vrot.slane %v187, 2
    %v189 = vadd.f32 %v187, %v188
    %v190 = vrot.slane %v189, 1
    %v191 = vadd.f32 %v189, %v190
    %v192 = vrot.slane %v170, 4
    %v193 = vadd.f32 %v170, %v192
    %v194 = vrot.slane %v193, 2
    %v195 = vadd.f32 %v193, %v194
    %v196 = vrot.slane %v195, 1
    %v197 = vadd.f32 %v195, %v196
    %v198 = vmul.f32 %v127, %v127
    %v199 = vmul.f32 %v129, %v129
    %v200 = vmul.f32 %v168, %v168
    %v201 = vmul.f32 %v170, %v170
    %v202 = vrot.slane %v198, 4
    %v203 = vadd.f32 %v198, %v202
    %v204 = vrot.slane %v203, 2
    %v205 = vadd.f32 %v203, %v204
    %v206 = vrot.slane %v205, 1
    %v207 = vadd.f32 %v205, %v206
    %v208 = vrot.slane %v199, 4
    %v209 = vadd.f32 %v199, %v208
    %v210 = vrot.slane %v209, 2
    %v211 = vadd.f32 %v209, %v210
    %v212 = vrot.slane %v211, 1
    %v213 = vadd.f32 %v211, %v212
    %v214 = vrot.slane %v200, 4
    %v215 = vadd.f32 %v200, %v214
    %v216 = vrot.slane %v215, 2
    %v217 = vadd.f32 %v215, %v216
    %v218 = vrot.slane %v217, 1
    %v219 = vadd.f32 %v217, %v218
    %v220 = vrot.slane %v201, 4
    %v221 = vadd.f32 %v201, %v220
    %v222 = vrot.slane %v221, 2
    %v223 = vadd.f32 %v221, %v222
    %v224 = vrot.slane %v223, 1
    %v225 = vadd.f32 %v223, %v224
    %vm226 = vcmask 1040384
    %v227 = vsel %vm226, %v179, %v207
    %v228 = vsel %vm226, %v185, %v213
    %v229 = vsel %vm226, %v191, %v219
    %v230 = vsel %vm226, %v197, %v225
    %v235 = vcombine.low %v227, %v228
    %v236 = vcombine.low %v229, %v230
    %v238 = vunpack.c.l.s4 1983009808
    %v239 = vunpack.c.0.s8 %v238
    %v240 = vlaneseq
    %v241 = vshrl.u32 %v240, 7
    %v242 = vsub.s32 %v239, %v241
    %v243 = vrot.slane %v235, %v242
    %v245 = vunpack.c.l.s4 1983009808
    %v246 = vunpack.c.0.s8 %v245
    %v247 = vlaneseq
    %v248 = vshrl.u32 %v247, 7
    %v249 = vsub.s32 %v246, %v248
    %v250 = vrot.slane %v236, %v249
    %v251 = vcombine.low %v243, %v250
    %253 = vst [vmem:[%s2] sm:$0xff] %v251
    // Predicated region
    $region18: #{critic_forward.2} parent=1 // pred_check
      _
    $region19: #{critic_forward.2} parent=1 // pred_check_branch
      %255 = sbr.rel (0) target = $region21
    $region20: #{critic_forward.2} parent=1 // pred_region
      _
    $region21: #{critic_forward.2} parent=1 // pred_fallthru
      _
    // Predicated region
    $region22: #{critic_forward.2} parent=1 // pred_check
      _
    $region23: #{critic_forward.2} parent=1 // pred_check_branch
      %257 = sbr.rel (0) target = $region25
    $region24: #{critic_forward.2} parent=1 // pred_region
      _
    $region25: #{critic_forward.2} parent=1 // pred_fallthru
      _
    %258 = vsyncpa [#allocation3], 1
    %259 = vsyncpa [#allocation5], 1

// kernel: critic_forward.3
$region0: #{critic_forward.3}
  #allocation0 [shape = 'u32[]', space=smem, size = 0x4, offset = 0x4, fixed_abs, tag = 'smem constant byte address 0x4 - core index']
  #allocation1 [shape = 'u32[144,128]{1,0:T(1,128)}', space=vmem, size = 0x12000, scoped, tag = 'internal scratch']
  #allocation2 [shape = 'f32[1]{0:T(128)S(6)}', space=smem, size = 0x200, scoped, tag = 'scoped memory for critic_forward.3']
  %s0 = inlined_call_operand.vmem [shape: f32[8,32], index: 0, kind: input, shape index: {}]
  %s1 = inlined_call_operand.vmem [shape: f32[8,8], index: 1, kind: input, shape index: {}]
  %s2 = inlined_call_operand.vmem [shape: bf16[32,512], index: 2, kind: input, shape index: {}]
  %s3 = inlined_call_operand.hbm [shape: bf16[512,256], index: 3, kind: input, shape index: {}]
  %s4 = inlined_call_operand.vmem [shape: f32[8,256], index: 4, kind: input, shape index: {}]
  %s5 = inlined_call_operand.hbm [shape: f32[4,512], index: 5, kind: input, shape index: {}]
  %s6 = inlined_call_operand.vmem [shape: f32[1,2,512], index: 6, kind: input, shape index: {}]
  %s7 = inlined_call_operand.<no memory space> [shape: f32[1], index: 7, kind: input, shape index: {}]
  %s8 = inlined_call_operand.vmem [shape: f32[8,1], index: 8, kind: output, shape index: {}]
  %s9 = sld [smem:[#allocation0]]
  $region50: #{critic_forward.3} parent=0
    _
  %s11 = ssub.s32 1, %s9
  %s12 = scalar_select 0, %s11, %s9
  %13 = sst [smem:[#allocation2]] %s7
  $region1: #{critic_forward.3} parent=0
    #allocation3 [shape = 'u8[262144]{0}', space=vmem, size = 0x40000, scoped, tag = 'input window, operand 3, single buffered']
    #allocation4 [shape = 's32[1]{0}', space=sflag, size = 0x4, scoped, tag = 'scoped memory for critic_forward.3']
    #allocation5 [shape = 'u8[8192]{0}', space=vmem, size = 0x2000, scoped, tag = 'input window, operand 5, single buffered']
    #allocation6 [shape = 's32[1]{0}', space=sflag, size = 0x4, scoped, tag = 'scoped memory for critic_forward.3']
    %14 = vsyncpa [#allocation4], 0
    %15 = vsyncpa [#allocation6], 0
    // Predicated region
    $region2: #{critic_forward.3} parent=1 // pred_check
      _
    $region3: #{critic_forward.3} parent=1 // pred_check_branch
      %17 = sbr.rel (0) target = $region5
    $region4: #{critic_forward.3} parent=1 // pred_region
      _
    $region5: #{critic_forward.3} parent=1 // pred_fallthru
      _
    // Predicated region
    $region6: #{critic_forward.3} parent=1 // pred_check
      _
    $region7: #{critic_forward.3} parent=1 // pred_check_branch
      %19 = sbr.rel (0) target = $region9
    $region8: #{critic_forward.3} parent=1 // pred_region
      _
    $region9: #{critic_forward.3} parent=1 // pred_fallthru
      _
    // Predicated region
    $region10: #{critic_forward.3} parent=1 // pred_check
      _
    $region11: #{critic_forward.3} parent=1 // pred_check_branch
      %21 = sbr.rel (0) target = $region13
    $region12: #{critic_forward.3} parent=1 // pred_region
      _
    $region13: #{critic_forward.3} parent=1 // pred_fallthru
      _
    // Predicated region
    $region14: #{critic_forward.3} parent=1 // pred_check
      _
    $region15: #{critic_forward.3} parent=1 // pred_check_branch
      %23 = sbr.rel (0) target = $region17
    $region16: #{critic_forward.3} parent=1 // pred_region
      %s25 = ssub.s32 8192, 8192
      %26 = vsyncadd [#allocation4], %s25
      %s27 = sshll.u32 [#allocation3], 4
      %s28 = int_to_ptr.vmem [resolvable:$true] %s27
      %33 = dma.hbm_to_vmem [thread:$0]  %s3, 8192, %s28, [#allocation4], 128, 128, 8
    $region17: #{critic_forward.3} parent=1 // pred_fallthru
      _
    // Predicated region
    $region18: #{critic_forward.3} parent=1 // pred_check
      _
    $region19: #{critic_forward.3} parent=1 // pred_check_branch
      %35 = sbr.rel (0) target = $region21
    $region20: #{critic_forward.3} parent=1 // pred_region
      _
    $region21: #{critic_forward.3} parent=1 // pred_fallthru
      _
    // Predicated region
    $region22: #{critic_forward.3} parent=1 // pred_check
      _
    $region23: #{critic_forward.3} parent=1 // pred_check_branch
      %37 = sbr.rel (0) target = $region25
    $region24: #{critic_forward.3} parent=1 // pred_region
      %s39 = ssub.s32 256, 256
      %40 = vsyncadd [#allocation6], %s39
      %s42 = sshll.u32 [#allocation5], 4
      %s43 = int_to_ptr.vmem [resolvable:$true] %s42
      %45 = dma.hbm_to_vmem [thread:$0]  %s5, 256, %s43, [#allocation6]
    $region25: #{critic_forward.3} parent=1 // pred_fallthru
      _
    // Predicated region
    $region26: #{critic_forward.3} parent=1 // pred_check
      _
    $region27: #{critic_forward.3} parent=1 // pred_check_branch
      %47 = sbr.rel (0) target = $region29
    $region28: #{critic_forward.3} parent=1 // pred_region
      _
    $region29: #{critic_forward.3} parent=1 // pred_fallthru
      _
    // Predicated region
    $region30: #{critic_forward.3} parent=1 // pred_check
      _
    $region31: #{critic_forward.3} parent=1 // pred_check_branch
      %49 = sbr.rel (0) target = $region33
    $region32: #{critic_forward.3} parent=1 // pred_region
      _
    $region33: #{critic_forward.3} parent=1 // pred_fallthru
      _
    // Predicated region
    $region34: #{critic_forward.3} parent=1 // pred_check
      _
    $region35: #{critic_forward.3} parent=1 // pred_check_branch
      %51 = sbr.rel (0) target = $region37
    $region36: #{critic_forward.3} parent=1 // pred_region
      %52 = dma.done [#allocation4], 8192
    $region37: #{critic_forward.3} parent=1 // pred_fallthru
      _
    // Predicated region
    $region38: #{critic_forward.3} parent=1 // pred_check
      _
    $region39: #{critic_forward.3} parent=1 // pred_check_branch
      %54 = sbr.rel (0) target = $region41
    $region40: #{critic_forward.3} parent=1 // pred_region
      %55 = dma.done [#allocation6], 256
    $region41: #{critic_forward.3} parent=1 // pred_fallthru
      _
    %v57 = vld [vmem:[%s0] sm:$0xff]
    %v58 = vpack.c.bf16 %v57, %v57
    %v59 = vld [vmem:[%s2] sm:$0xff]
    %v60 = vld [vmem:[%s2 + $0x8] sm:$0xff]
    %v61 = vld [vmem:[%s2 + $0x10] sm:$0xff]
    %v62 = vld [vmem:[%s2 + $0x18] sm:$0xff]
    %v63 = vld [vmem:[%s2 + $0x20] sm:$0xff]
    %v64 = vld [vmem:[%s2 + $0x28] sm:$0xff]
    %v65 = vld [vmem:[%s2 + $0x30] sm:$0xff]
    %v66 = vld [vmem:[%s2 + $0x38] sm:$0xff]
    %v75 = vunpack.c.l.b16 %v59
    %v76 = vunpack.c.h.b16 %v59
    %v77 = vunpack.c.l.b16 %v60
    %v78 = vunpack.c.h.b16 %v60
    %v79 = vunpack.c.l.b16 %v61
    %v80 = vunpack.c.h.b16 %v61
    %v81 = vunpack.c.l.b16 %v62
    %v82 = vunpack.c.h.b16 %v62
    %v83 = vunpack.c.l.b16 %v63
    %v84 = vunpack.c.h.b16 %v63
    %v85 = vunpack.c.l.b16 %v64
    %v86 = vunpack.c.h.b16 %v64
    %v87 = vunpack.c.l.b16 %v65
    %v88 = vunpack.c.h.b16 %v65
    %v89 = vunpack.c.l.b16 %v66
    %v90 = vunpack.c.h.b16 %v66
    %v91 = vpack.c.b16 %v79, %v75
    %v92 = vpack.c.b16 %v80, %v76
    %v93 = vpack.c.b16 %v81, %v77
    %v94 = vpack.c.b16 %v82, %v78
    %v95 = vpack.c.b16 %v87, %v83
    %v96 = vpack.c.b16 %v88, %v84
    %v97 = vpack.c.b16 %v89, %v85
    %v98 = vpack.c.b16 %v90, %v86
    %vm107 = vcmask 261120
    %v109 = vsel %vm107, %v58, 0
    %111 = vmatprep.subr.bf16.mxu0 %v92
    %112 = vmatpush1.bf16.msra.mxu0 %v91
    %113 = vmatprep.subr.bf16.mxu0 %v96
    %114 = vmatpush1.bf16.msra.mxu0 %v95
    %115 = vmatprep.subr.bf16.mxu0 0
    %116 = vmatpush1.bf16.msra.mxu0 0
    %117 = vmatprep.subr.bf16.mxu0 0
    %118 = vmatpush1.bf16.msra.mxu0 0
    %119 = vmatprep.subr.bf16.mxu0 0
    %120 = vmatpush1.bf16.msra.mxu0 0
    %121 = vmatprep.subr.bf16.mxu0 0
    %122 = vmatpush1.bf16.msra.mxu0 0
    %123 = vmatprep.subr.bf16.mxu0 0
    %124 = vmatpush1.bf16.msra.mxu0 0
    %125 = vmatprep.subr.bf16.mxu0 0
    %126 = vmatpush1.bf16.msra.mxu0 0
    %127 = vmatprep.subr.bf16.mxu0 0
    %128 = vmatpush1.bf16.msra.mxu0 0
    %129 = vmatprep.subr.bf16.mxu0 0
    %130 = vmatpush1.bf16.msra.mxu0 0
    %131 = vmatprep.subr.bf16.mxu0 0
    %132 = vmatpush1.bf16.msra.mxu0 0
    %133 = vmatprep.subr.bf16.mxu0 0
    %134 = vmatpush1.bf16.msra.mxu0 0
    %135 = vmatprep.subr.bf16.mxu0 0
    %136 = vmatpush1.bf16.msra.mxu0 0
    %137 = vmatprep.subr.bf16.mxu0 0
    %138 = vmatpush1.bf16.msra.mxu0 0
    %139 = vmatprep.subr.bf16.mxu0 0
    %140 = vmatpush1.bf16.msra.mxu0 0
    %141 = vmatprep.subr.bf16.mxu0 0
    %142 = vmatpush1.bf16.msra.mxu0 0
    %143 = vmatprep.mubr.bf16.mxu0 0
    %144 = vmatmul.mubr.bf16.gmra.mrb[0].mxu0 %v109
    %v145 = vpop.f32.mrb[0].mxu0
    %v146 = vadd.f32 0.0, %v145
    %v147 = vpop.f32.mrb[0].mxu0
    %v148 = vadd.f32 0.0, %v147
    %v149 = vpop.f32.mrb[0].mxu0
    %v150 = vpop.f32.mrb[0].mxu0
    %151 = vdwg.mxu0
    %152 = vmatprep.subr.bf16.mxu0 %v94
    %153 = vmatpush1.bf16.msra.mxu0 %v93
    %154 = vmatprep.subr.bf16.mxu0 %v98
    %155 = vmatpush1.bf16.msra.mxu0 %v97
    %156 = vmatprep.subr.bf16.mxu0 0
    %157 = vmatpush1.bf16.msra.mxu0 0
    %158 = vmatprep.subr.bf16.mxu0 0
    %159 = vmatpush1.bf16.msra.mxu0 0
    %160 = vmatprep.subr.bf16.mxu0 0
    %161 = vmatpush1.bf16.msra.mxu0 0
    %162 = vmatprep.subr.bf16.mxu0 0
    %163 = vmatpush1.bf16.msra.mxu0 0
    %164 = vmatprep.subr.bf16.mxu0 0
    %165 = vmatpush1.bf16.msra.mxu0 0
    %166 = vmatprep.subr.bf16.mxu0 0
    %167 = vmatpush1.bf16.msra.mxu0 0
    %168 = vmatprep.subr.bf16.mxu0 0
    %169 = vmatpush1.bf16.msra.mxu0 0
    %170 = vmatprep.subr.bf16.mxu0 0
    %171 = vmatpush1.bf16.msra.mxu0 0
    %172 = vmatprep.subr.bf16.mxu0 0
    %173 = vmatpush1.bf16.msra.mxu0 0
    %174 = vmatprep.subr.bf16.mxu0 0
    %175 = vmatpush1.bf16.msra.mxu0 0
    %176 = vmatprep.subr.bf16.mxu0 0
    %177 = vmatpush1.bf16.msra.mxu0 0
    %178 = vmatprep.subr.bf16.mxu0 0
    %179 = vmatpush1.bf16.msra.mxu0 0
    %180 = vmatprep.subr.bf16.mxu0 0
    %181 = vmatpush1.bf16.msra.mxu0 0
    %182 = vmatprep.subr.bf16.mxu0 0
    %183 = vmatpush1.bf16.msra.mxu0 0
    %184 = vmatprep.mubr.bf16.mxu0 0
    %185 = vmatmul.mubr.bf16.gmra.mrb[0].mxu0 %v109
    %v186 = vpop.f32.mrb[0].mxu0
    %v187 = vadd.f32 0.0, %v186
    %v188 = vpop.f32.mrb[0].mxu0
    %v189 = vadd.f32 0.0, %v188
    %v190 = vpop.f32.mrb[0].mxu0
    %v191 = vpop.f32.mrb[0].mxu0
    %192 = vdwg.mxu0
    %v193 = vld [vmem:[%s6] sm:$0xff]
    %v194 = vadd.f32 %v193, 0.0
    %v195 = vmul.f32 %v194, 0.125
    %v196 = vmul.f32 %v195, %v195
    %v198 = vrot.slane %v196, 7
    %v200 = vsub.f32 %v195, %v198
    %v201 = vmax.f32 %v200, 0.0
    %v202 = vld [vmem:[#allocation5] ss:$4 sm:$0xf]
    %s203 = scalar_lea.vmem [#allocation5], 1
    %v204 = vld [vmem:[%s203] ss:$4 sm:$0xf]
    %v205 = vadd.f32 %v201, 1e-05
    %v206 = vrsqrt.pop %v205
    %v209 = vunpack.c.l.s4 1966171168
    %v210 = vunpack.c.0.s8 %v209
    %v211 = vlaneseq
    %v212 = vshrl.u32 %v211, 7
    %v213 = vsub.s32 %v210, %v212
    %v214 = vrot.slane %v206, %v213
    %v215 = vcombine.high %v214, %v214
    %v217 = vmul.f32 %v202, %v215
    %v220 = vunpack.c.l.s4 857870592
    %v221 = vunpack.c.0.s8 %v220
    %v222 = vlaneseq
    %v223 = vshrl.u32 %v222, 7
    %v224 = vsub.s32 %v221, %v223
    %v225 = vrot.slane %v217, %v224
    %v227 = vmul.f32 %v195, %v225
    %v230 = vunpack.c.l.s4 1966171168
    %v231 = vunpack.c.0.s8 %v230
    %v232 = vlaneseq
    %v233 = vshrl.u32 %v232, 7
    %v234 = vsub.s32 %v231, %v233
    %v235 = vrot.slane %v227, %v234
    %v237 = vsub.f32 %v204, %v235
    %v238 = vlaneseq
    %v239 = vshrl.u32 %v238, 7
    %v240 = vsub.s32 0, %v239
    %v241 = vrot.slane %v217, %v240
    %v242 = vlaneseq
    %v243 = vshrl.u32 %v242, 7
    %v244 = vsub.s32 1, %v243
    %v245 = vrot.slane %v217, %v244
    %v246 = vlaneseq
    %v247 = vshrl.u32 %v246, 7
    %v248 = vsub.s32 2, %v247
    %v249 = vrot.slane %v217, %v248
    %v250 = vlaneseq
    %v251 = vshrl.u32 %v250, 7
    %v252 = vsub.s32 3, %v251
    %v253 = vrot.slane %v217, %v252
    %v258 = vmul.f32 %v146, %v241
    %v259 = vmul.f32 %v148, %v245
    %v260 = vmul.f32 %v187, %v249
    %v261 = vmul.f32 %v189, %v253
    %v263 = vlaneseq
    %v264 = vshrl.u32 %v263, 7
    %v265 = vsub.s32 0, %v264
    %v266 = vrot.slane %v237, %v265
    %v267 = vlaneseq
    %v268 = vshrl.u32 %v267, 7
    %v269 = vsub.s32 1, %v268
    %v270 = vrot.slane %v237, %v269
    %v271 = vlaneseq
    %v272 = vshrl.u32 %v271, 7
    %v273 = vsub.s32 2, %v272
    %v274 = vrot.slane %v237, %v273
    %v275 = vlaneseq
    %v276 = vshrl.u32 %v275, 7
    %v277 = vsub.s32 3, %v276
    %v278 = vrot.slane %v237, %v277
    %v283 = vadd.f32 %v258, %v266
    %v284 = vadd.f32 %v259, %v270
    %v285 = vadd.f32 %v260, %v274
    %v286 = vadd.f32 %v261, %v278
    %v287 = vmax.f32 %v283, 0.0
    %v288 = vmax.f32 %v284, 0.0
    %v289 = vmax.f32 %v285, 0.0
    %v290 = vmax.f32 %v286, 0.0
    %v291 = vpack.c.bf16 %v287, %v287
    %v292 = vpack.c.bf16 %v288, %v288
    %v293 = vpack.c.bf16 %v289, %v289
    %v294 = vpack.c.bf16 %v290, %v290
    %v295 = vld [vmem:[#allocation3] sm:$0xff]
    %v296 = vld [vmem:[#allocation3 + $0x8] sm:$0xff]
    %v297 = vld [vmem:[#allocation3 + $0x10] sm:$0xff]
    %v298 = vld [vmem:[#allocation3 + $0x18] sm:$0xff]
    %v299 = vld [vmem:[#allocation3 + $0x20] sm:$0xff]
    %v300 = vld [vmem:[#allocation3 + $0x28] sm:$0xff]
    %v301 = vld [vmem:[#allocation3 + $0x30] sm:$0xff]
    %v302 = vld [vmem:[#allocation3 + $0x38] sm:$0xff]
    %v303 = vld [vmem:[#allocation3 + $0x40] sm:$0xff]
    %v304 = vld [vmem:[#allocation3 + $0x48] sm:$0xff]
    %v305 = vld [vmem:[#allocation3 + $0x50] sm:$0xff]
    %v306 = vld [vmem:[#allocation3 + $0x58] sm:$0xff]
    %v307 = vld [vmem:[#allocation3 + $0x60] sm:$0xff]
    %v308 = vld [vmem:[#allocation3 + $0x68] sm:$0xff]
    %v309 = vld [vmem:[#allocation3 + $0x70] sm:$0xff]
    %v310 = vld [vmem:[#allocation3 + $0x78] sm:$0xff]
    %v311 = vld [vmem:[#allocation3 + $0x80] sm:$0xff]
    %v312 = vld [vmem:[#allocation3 + $0x88] sm:$0xff]
    %v313 = vld [vmem:[#allocation3 + $0x90] sm:$0xff]
    %v314 = vld [vmem:[#allocation3 + $0x98] sm:$0xff]
    %v315 = vld [vmem:[#allocation3 + $0xa0] sm:$0xff]
    %v316 = vld [vmem:[#allocation3 + $0xa8] sm:$0xff]
    %v317 = vld [vmem:[#allocation3 + $0xb0] sm:$0xff]
    %v318 = vld [vmem:[#allocation3 + $0xb8] sm:$0xff]
    %v319 = vld [vmem:[#allocation3 + $0xc0] sm:$0xff]
    %v320 = vld [vmem:[#allocation3 + $0xc8] sm:$0xff]
    %v321 = vld [vmem:[#allocation3 + $0xd0] sm:$0xff]
    %v322 = vld [vmem:[#allocation3 + $0xd8] sm:$0xff]
    %v323 = vld [vmem:[#allocation3 + $0xe0] sm:$0xff]
    %v324 = vld [vmem:[#allocation3 + $0xe8] sm:$0xff]
    %v325 = vld [vmem:[#allocation3 + $0xf0] sm:$0xff]
    %v326 = vld [vmem:[#allocation3 + $0xf8] sm:$0xff]
    %v327 = vld [vmem:[#allocation3 + $0x100] sm:$0xff]
    %v328 = vld [vmem:[#allocation3 + $0x108] sm:$0xff]
    %v329 = vld [vmem:[#allocation3 + $0x110] sm:$0xff]
    %v330 = vld [vmem:[#allocation3 + $0x118] sm:$0xff]
    %v331 = vld [vmem:[#allocation3 + $0x120] sm:$0xff]
    %v332 = vld [vmem:[#allocation3 + $0x128] sm:$0xff]
    %v333 = vld [vmem:[#allocation3 + $0x130] sm:$0xff]
    %v334 = vld [vmem:[#allocation3 + $0x138] sm:$0xff]
    %v335 = vld [vmem:[#allocation3 + $0x140] sm:$0xff]
    %v336 = vld [vmem:[#allocation3 + $0x148] sm:$0xff]
    %v337 = vld [vmem:[#allocation3 + $0x150] sm:$0xff]
    %v338 = vld [vmem:[#allocation3 + $0x158] sm:$0xff]
    %v339 = vld [vmem:[#allocation3 + $0x160] sm:$0xff]
    %v340 = vld [vmem:[#allocation3 + $0x168] sm:$0xff]
    %v341 = vld [vmem:[#allocation3 + $0x170] sm:$0xff]
    %v342 = vld [vmem:[#allocation3 + $0x178] sm:$0xff]
    %v343 = vld [vmem:[#allocation3 + $0x180] sm:$0xff]
    %v344 = vld [vmem:[#allocation3 + $0x188] sm:$0xff]
    %v345 = vld [vmem:[#allocation3 + $0x190] sm:$0xff]
    %v346 = vld [vmem:[#allocation3 + $0x198] sm:$0xff]
    %v347 = vld [vmem:[#allocation3 + $0x1a0] sm:$0xff]
    %v348 = vld [vmem:[#allocation3 + $0x1a8] sm:$0xff]
    %v349 = vld [vmem:[#allocation3 + $0x1b0] sm:$0xff]
    %v350 = vld [vmem:[#allocation3 + $0x1b8] sm:$0xff]
    %v351 = vld [vmem:[#allocation3 + $0x1c0] sm:$0xff]
    %v352 = vld [vmem:[#allocation3 + $0x1c8] sm:$0xff]
    %v353 = vld [vmem:[#allocation3 + $0x1d0] sm:$0xff]
    %v354 = vld [vmem:[#allocation3 + $0x1d8] sm:$0xff]
    %v355 = vld [vmem:[#allocation3 + $0x1e0] sm:$0xff]
    %v356 = vld [vmem:[#allocation3 + $0x1e8] sm:$0xff]
    %v357 = vld [vmem:[#allocation3 + $0x1f0] sm:$0xff]
    %v358 = vld [vmem:[#allocation3 + $0x1f8] sm:$0xff]
    %s359 = scalar_lea.vmem [#allocation5], 2
    %v360 = vld [vmem:[%s359] ss:$4 sm:$0x3]
    %v362 = vlaneseq
    %v363 = vshrl.u32 %v362, 7
    %v364 = vsub.s32 0, %v363
    %v365 = vrot.slane %v360, %v364
    %v366 = vlaneseq
    %v367 = vshrl.u32 %v366, 7
    %v368 = vsub.s32 1, %v367
    %v369 = vrot.slane %v360, %v368
    %v436 = vunpack.c.l.b16 %v295
    %v437 = vunpack.c.h.b16 %v295
    %v438 = vunpack.c.l.b16 %v296
    %v439 = vunpack.c.h.b16 %v296
    %v440 = vunpack.c.l.b16 %v297
    %v441 = vunpack.c.h.b16 %v297
    %v442 = vunpack.c.l.b16 %v298
    %v443 = vunpack.c.h.b16 %v298
    %v444 = vunpack.c.l.b16 %v299
    %v445 = vunpack.c.h.b16 %v299
    %v446 = vunpack.c.l.b16 %v300
    %v447 = vunpack.c.h.b16 %v300
    %v448 = vunpack.c.l.b16 %v301
    %v449 = vunpack.c.h.b16 %v301
    %v450 = vunpack.c.l.b16 %v302
    %v451 = vunpack.c.h.b16 %v302
    %v452 = vunpack.c.l.b16 %v303
    %v453 = vunpack.c.h.b16 %v303
    %v454 = vunpack.c.l.b16 %v304
    %v455 = vunpack.c.h.b16 %v304
    %v456 = vunpack.c.l.b16 %v305
    %v457 = vunpack.c.h.b16 %v305
    %v458 = vunpack.c.l.b16 %v306
    %v459 = vunpack.c.h.b16 %v306
    %v460 = vunpack.c.l.b16 %v307
    %v461 = vunpack.c.h.b16 %v307
    %v462 = vunpack.c.l.b16 %v308
    %v463 = vunpack.c.h.b16 %v308
    %v464 = vunpack.c.l.b16 %v309
    %v465 = vunpack.c.h.b16 %v309
    %v466 = vunpack.c.l.b16 %v310
    %v467 = vunpack.c.h.b16 %v310
    %v468 = vunpack.c.l.b16 %v311
    %v469 = vunpack.c.h.b16 %v311
    %v470 = vunpack.c.l.b16 %v312
    %v471 = vunpack.c.h.b16 %v312
    %v472 = vunpack.c.l.b16 %v313
    %v473 = vunpack.c.h.b16 %v313
    %v474 = vunpack.c.l.b16 %v314
    %v475 = vunpack.c.h.b16 %v314
    %v476 = vunpack.c.l.b16 %v315
    %v477 = vunpack.c.h.b16 %v315
    %v478 = vunpack.c.l.b16 %v316
    %v479 = vunpack.c.h.b16 %v316
    %v480 = vunpack.c.l.b16 %v317
    %v481 = vunpack.c.h.b16 %v317
    %v482 = vunpack.c.l.b16 %v318
    %v483 = vunpack.c.h.b16 %v318
    %v484 = vunpack.c.l.b16 %v319
    %v485 = vunpack.c.h.b16 %v319
    %v486 = vunpack.c.l.b16 %v320
    %v487 = vunpack.c.h.b16 %v320
    %v488 = vunpack.c.l.b16 %v321
    %v489 = vunpack.c.h.b16 %v321
    %v490 = vunpack.c.l.b16 %v322
    %v491 = vunpack.c.h.b16 %v322
    %v492 = vunpack.c.l.b16 %v323
    %v493 = vunpack.c.h.b16 %v323
    %v494 = vunpack.c.l.b16 %v324
    %v495 = vunpack.c.h.b16 %v324
    %v496 = vunpack.c.l.b16 %v325
    %v497 = vunpack.c.h.b16 %v325
    %v498 = vunpack.c.l.b16 %v326
    %v499 = vunpack.c.h.b16 %v326
    %v500 = vunpack.c.l.b16 %v327
    %v501 = vunpack.c.h.b16 %v327
    %v502 = vunpack.c.l.b16 %v328
    %v503 = vunpack.c.h.b16 %v328
    %v504 = vunpack.c.l.b16 %v329
    %v505 = vunpack.c.h.b16 %v329
    %v506 = vunpack.c.l.b16 %v330
    %v507 = vunpack.c.h.b16 %v330
    %v508 = vunpack.c.l.b16 %v331
    %v509 = vunpack.c.h.b16 %v331
    %v510 = vunpack.c.l.b16 %v332
    %v511 = vunpack.c.h.b16 %v332
    %v512 = vunpack.c.l.b16 %v333
    %v513 = vunpack.c.h.b16 %v333
    %v514 = vunpack.c.l.b16 %v334
    %v515 = vunpack.c.h.b16 %v334
    %v516 = vunpack.c.l.b16 %v335
    %v517 = vunpack.c.h.b16 %v335
    %v518 = vunpack.c.l.b16 %v336
    %v519 = vunpack.c.h.b16 %v336
    %v520 = vunpack.c.l.b16 %v337
    %v521 = vunpack.c.h.b16 %v337
    %v522 = vunpack.c.l.b16 %v338
    %v523 = vunpack.c.h.b16 %v338
    %v524 = vunpack.c.l.b16 %v339
    %v525 = vunpack.c.h.b16 %v339
    %v526 = vunpack.c.l.b16 %v340
    %v527 = vunpack.c.h.b16 %v340
    %v528 = vunpack.c.l.b16 %v341
    %v529 = vunpack.c.h.b16 %v341
    %v530 = vunpack.c.l.b16 %v342
    %v531 = vunpack.c.h.b16 %v342
    %v532 = vunpack.c.l.b16 %v343
    %v533 = vunpack.c.h.b16 %v343
    %v534 = vunpack.c.l.b16 %v344
    %v535 = vunpack.c.h.b16 %v344
    %v536 = vunpack.c.l.b16 %v345
    %v537 = vunpack.c.h.b16 %v345
    %v538 = vunpack.c.l.b16 %v346
    %v539 = vunpack.c.h.b16 %v346
    %v540 = vunpack.c.l.b16 %v347
    %v541 = vunpack.c.h.b16 %v347
    %v542 = vunpack.c.l.b16 %v348
    %v543 = vunpack.c.h.b16 %v348
    %v544 = vunpack.c.l.b16 %v349
    %v545 = vunpack.c.h.b16 %v349
    %v546 = vunpack.c.l.b16 %v350
    %v547 = vunpack.c.h.b16 %v350
    %v548 = vunpack.c.l.b16 %v351
    %v549 = vunpack.c.h.b16 %v351
    %v550 = vunpack.c.l.b16 %v352
    %v551 = vunpack.c.h.b16 %v352
    %v552 = vunpack.c.l.b16 %v353
    %v553 = vunpack.c.h.b16 %v353
    %v554 = vunpack.c.l.b16 %v354
    %v555 = vunpack.c.h.b16 %v354
    %v556 = vunpack.c.l.b16 %v355
    %v557 = vunpack.c.h.b16 %v355
    %v558 = vunpack.c.l.b16 %v356
    %v559 = vunpack.c.h.b16 %v356
    %v560 = vunpack.c.l.b16 %v357
    %v561 = vunpack.c.h.b16 %v357
    %v562 = vunpack.c.l.b16 %v358
    %v563 = vunpack.c.h.b16 %v358
    %v564 = vpack.c.b16 %v438, %v436
    %v565 = vpack.c.b16 %v439, %v437
    %v566 = vpack.c.b16 %v442, %v440
    %v567 = vpack.c.b16 %v443, %v441
    %v568 = vpack.c.b16 %v446, %v444
    %v569 = vpack.c.b16 %v447, %v445
    %v570 = vpack.c.b16 %v450, %v448
    %v571 = vpack.c.b16 %v451, %v449
    %v572 = vpack.c.b16 %v454, %v452
    %v573 = vpack.c.b16 %v455, %v453
    %v574 = vpack.c.b16 %v458, %v456
    %v575 = vpack.c.b16 %v459, %v457
    %v576 = vpack.c.b16 %v462, %v460
    %v577 = vpack.c.b16 %v463, %v461
    %v578 = vpack.c.b16 %v466, %v464
    %v579 = vpack.c.b16 %v467, %v465
    %v580 = vpack.c.b16 %v470, %v468
    %v581 = vpack.c.b16 %v471, %v469
    %v582 = vpack.c.b16 %v474, %v472
    %v583 = vpack.c.b16 %v475, %v473
    %v584 = vpack.c.b16 %v478, %v476
    %v585 = vpack.c.b16 %v479, %v477
    %v586 = vpack.c.b16 %v482, %v480
    %v587 = vpack.c.b16 %v483, %v481
    %v588 = vpack.c.b16 %v486, %v484
    %v589 = vpack.c.b16 %v487, %v485
    %v590 = vpack.c.b16 %v490, %v488
    %v591 = vpack.c.b16 %v491, %v489
    %v592 = vpack.c.b16 %v494, %v492
    %v593 = vpack.c.b16 %v495, %v493
    %v594 = vpack.c.b16 %v498, %v496
    %v595 = vpack.c.b16 %v499, %v497
    %v596 = vpack.c.b16 %v502, %v500
    %v597 = vpack.c.b16 %v503, %v501
    %v598 = vpack.c.b16 %v506, %v504
    %v599 = vpack.c.b16 %v507, %v505
    %v600 = vpack.c.b16 %v510, %v508
    %v601 = vpack.c.b16 %v511, %v509
    %v602 = vpack.c.b16 %v514, %v512
    %v603 = vpack.c.b16 %v515, %v513
    %v604 = vpack.c.b16 %v518, %v516
    %v605 = vpack.c.b16 %v519, %v517
    %v606 = vpack.c.b16 %v522, %v520
    %v607 = vpack.c.b16 %v523, %v521
    %v608 = vpack.c.b16 %v526, %v524
    %v609 = vpack.c.b16 %v527, %v525
    %v610 = vpack.c.b16 %v530, %v528
    %v611 = vpack.c.b16 %v531, %v529
    %v612 = vpack.c.b16 %v534, %v532
    %v613 = vpack.c.b16 %v535, %v533
    %v614 = vpack.c.b16 %v538, %v536
    %v615 = vpack.c.b16 %v539, %v537
    %v616 = vpack.c.b16 %v542, %v540
    %v617 = vpack.c.b16 %v543, %v541
    %v618 = vpack.c.b16 %v546, %v544
    %v619 = vpack.c.b16 %v547, %v545
    %v620 = vpack.c.b16 %v550, %v548
    %v621 = vpack.c.b16 %v551, %v549
    %v622 = vpack.c.b16 %v554, %v552
    %v623 = vpack.c.b16 %v555, %v553
    %v624 = vpack.c.b16 %v558, %v556
    %v625 = vpack.c.b16 %v559, %v557
    %v626 = vpack.c.b16 %v562, %v560
    %v627 = vpack.c.b16 %v563, %v561
    %692 = vmatprep.subr.bf16.mxu0 %v565
    %693 = vmatpush1.bf16.msra.mxu0 %v564
    %694 = vmatprep.subr.bf16.mxu0 %v567
    %695 = vmatpush1.bf16.msra.mxu0 %v566
    %696 = vmatprep.subr.bf16.mxu0 %v569
    %697 = vmatpush1.bf16.msra.mxu0 %v568
    %698 = vmatprep.subr.bf16.mxu0 %v571
    %699 = vmatpush1.bf16.msra.mxu0 %v570
    %700 = vmatprep.subr.bf16.mxu0 %v573
    %701 = vmatpush1.bf16.msra.mxu0 %v572
    %702 = vmatprep.subr.bf16.mxu0 %v575
    %703 = vmatpush1.bf16.msra.mxu0 %v574
    %704 = vmatprep.subr.bf16.mxu0 %v577
    %705 = vmatpush1.bf16.msra.mxu0 %v576
    %706 = vmatprep.subr.bf16.mxu0 %v579
    %707 = vmatpush1.bf16.msra.mxu0 %v578
    %708 = vmatprep.subr.bf16.mxu0 %v581
    %709 = vmatpush1.bf16.msra.mxu0 %v580
    %710 = vmatprep.subr.bf16.mxu0 %v583
    %711 = vmatpush1.bf16.msra.mxu0 %v582
    %712 = vmatprep.subr.bf16.mxu0 %v585
    %713 = vmatpush1.bf16.msra.mxu0 %v584
    %714 = vmatprep.subr.bf16.mxu0 %v587
    %715 = vmatpush1.bf16.msra.mxu0 %v586
    %716 = vmatprep.subr.bf16.mxu0 %v589
    %717 = vmatpush1.bf16.msra.mxu0 %v588
    %718 = vmatprep.subr.bf16.mxu0 %v591
    %719 = vmatpush1.bf16.msra.mxu0 %v590
    %720 = vmatprep.subr.bf16.mxu0 %v593
    %721 = vmatpush1.bf16.msra.mxu0 %v592
    %722 = vmatprep.subr.bf16.mxu0 %v595
    %723 = vmatpush1.bf16.msra.mxu0 %v594
    %724 = vmatprep.mubr.bf16.mxu0 %v292
    %725 = vmatmul.mubr.bf16.gmra.mrb[0].mxu0 %v291
    %v726 = vpop.f32.mrb[0].mxu0
    %v727 = vadd.f32 %v365, %v726
    %v728 = vpop.f32.mrb[0].mxu0
    %v729 = vadd.f32 %v369, %v728
    %v730 = vpop.f32.mrb[0].mxu0
    %v731 = vpop.f32.mrb[0].mxu0
    %732 = vdwg.mxu0
    %733 = vmatprep.subr.bf16.mxu0 %v597
    %734 = vmatpush1.bf16.msra.mxu0 %v596
    %735 = vmatprep.subr.bf16.mxu0 %v599
    %736 = vmatpush1.bf16.msra.mxu0 %v598
    %737 = vmatprep.subr.bf16.mxu0 %v601
    %738 = vmatpush1.bf16.msra.mxu0 %v600
    %739 = vmatprep.subr.bf16.mxu0 %v603
    %740 = vmatpush1.bf16.msra.mxu0 %v602
    %741 = vmatprep.subr.bf16.mxu0 %v605
    %742 = vmatpush1.bf16.msra.mxu0 %v604
    %743 = vmatprep.subr.bf16.mxu0 %v607
    %744 = vmatpush1.bf16.msra.mxu0 %v606
    %745 = vmatprep.subr.bf16.mxu0 %v609
    %746 = vmatpush1.bf16.msra.mxu0 %v608
    %747 = vmatprep.subr.bf16.mxu0 %v611
    %748 = vmatpush1.bf16.msra.mxu0 %v610
    %749 = vmatprep.subr.bf16.mxu0 %v613
    %750 = vmatpush1.bf16.msra.mxu0 %v612
    %751 = vmatprep.subr.bf16.mxu0 %v615
    %752 = vmatpush1.bf16.msra.mxu0 %v614
    %753 = vmatprep.subr.bf16.mxu0 %v617
    %754 = vmatpush1.bf16.msra.mxu0 %v616
    %755 = vmatprep.subr.bf16.mxu0 %v619
    %756 = vmatpush1.bf16.msra.mxu0 %v618
    %757 = vmatprep.subr.bf16.mxu0 %v621
    %758 = vmatpush1.bf16.msra.mxu0 %v620
    %759 = vmatprep.subr.bf16.mxu0 %v623
    %760 = vmatpush1.bf16.msra.mxu0 %v622
    %761 = vmatprep.subr.bf16.mxu0 %v625
    %762 = vmatpush1.bf16.msra.mxu0 %v624
    %763 = vmatprep.subr.bf16.mxu0 %v627
    %764 = vmatpush1.bf16.msra.mxu0 %v626
    %765 = vmatprep.mubr.bf16.mxu0 %v294
    %766 = vmatmul.mubr.bf16.gmra.mrb[0].mxu0 %v293
    %v767 = vpop.f32.mrb[0].mxu0
    %v768 = vadd.f32 %v727, %v767
    %v769 = vpop.f32.mrb[0].mxu0
    %v770 = vadd.f32 %v729, %v769
    %v771 = vpop.f32.mrb[0].mxu0
    %v772 = vpop.f32.mrb[0].mxu0
    %773 = vdwg.mxu0
    %v774 = vld [vmem:[%s1] sm:$0xff]
    %v775 = vld [vmem:[%s4] ss:$8 sm:$0x3]
    %777 = vset.pattern.permute.xlu0 0
    %778 = vperm.xlu0 %777, %v774
    %v779 = vpop.permute.xlu0 %778
    %v782 = vlaneseq
    %v783 = vshrl.u32 %v782, 7
    %v784 = vsub.s32 0, %v783
    %v785 = vrot.slane %v775, %v784
    %v786 = vlaneseq
    %v787 = vshrl.u32 %v786, 7
    %v788 = vsub.s32 1, %v787
    %v789 = vrot.slane %v775, %v788
    %v792 = vmul.f32 %v779, %v785
    %v793 = vmul.f32 %v779, %v789
    %v794 = vadd.f32 %v768, %v792
    %v795 = vadd.f32 %v770, %v793
    %s796 = scalar_lea.vmem %s4, 1
    %v797 = vld [vmem:[%s796] ss:$8 sm:$0x3]
    %798 = vset.pattern.permute.xlu0 1
    %799 = vperm.xlu0 %798, %v774
    %v800 = vpop.permute.xlu0 %799
    %v803 = vlaneseq
    %v804 = vshrl.u32 %v803, 7
    %v805 = vsub.s32 0, %v804
    %v806 = vrot.slane %v797, %v805
    %v807 = vlaneseq
    %v808 = vshrl.u32 %v807, 7
    %v809 = vsub.s32 1, %v808
    %v810 = vrot.slane %v797, %v809
    %v813 = vmul.f32 %v800, %v806
    %v814 = vmul.f32 %v800, %v810
    %v815 = vadd.f32 %v794, %v813
    %v816 = vadd.f32 %v795, %v814
    %s817 = scalar_lea.vmem %s4, 2
    %v818 = vld [vmem:[%s817] ss:$8 sm:$0x3]
    %819 = vset.pattern.permute.xlu0 2
    %820 = vperm.xlu0 %819, %v774
    %v821 = vpop.permute.xlu0 %820
    %v824 = vlaneseq
    %v825 = vshrl.u32 %v824, 7
    %v826 = vsub.s32 0, %v825
    %v827 = vrot.slane %v818, %v826
    %v828 = vlaneseq
    %v829 = vshrl.u32 %v828, 7
    %v830 = vsub.s32 1, %v829
    %v831 = vrot.slane %v818, %v830
    %v834 = vmul.f32 %v821, %v827
    %v835 = vmul.f32 %v821, %v831
    %v836 = vadd.f32 %v815, %v834
    %v837 = vadd.f32 %v816, %v835
    %s838 = scalar_lea.vmem %s4, 3
    %v839 = vld [vmem:[%s838] ss:$8 sm:$0x3]
    %840 = vset.pattern.permute.xlu0 3
    %841 = vperm.xlu0 %840, %v774
    %v842 = vpop.permute.xlu0 %841
    %v845 = vlaneseq
    %v846 = vshrl.u32 %v845, 7
    %v847 = vsub.s32 0, %v846
    %v848 = vrot.slane %v839, %v847
    %v849 = vlaneseq
    %v850 = vshrl.u32 %v849, 7
    %v851 = vsub.s32 1, %v850
    %v852 = vrot.slane %v839, %v851
    %v855 = vmul.f32 %v842, %v848
    %v856 = vmul.f32 %v842, %v852
    %v857 = vadd.f32 %v836, %v855
    %v858 = vadd.f32 %v837, %v856
    %s859 = scalar_lea.vmem %s4, 4
    %v860 = vld [vmem:[%s859] ss:$8 sm:$0x3]
    %861 = vset.pattern.permute.xlu0 4
    %862 = vperm.xlu0 %861, %v774
    %v863 = vpop.permute.xlu0 %862
    %v866 = vlaneseq
    %v867 = vshrl.u32 %v866, 7
    %v868 = vsub.s32 0, %v867
    %v869 = vrot.slane %v860, %v868
    %v870 = vlaneseq
    %v871 = vshrl.u32 %v870, 7
    %v872 = vsub.s32 1, %v871
    %v873 = vrot.slane %v860, %v872
    %v876 = vmul.f32 %v863, %v869
    %v877 = vmul.f32 %v863, %v873
    %v878 = vadd.f32 %v857, %v876
    %v879 = vadd.f32 %v858, %v877
    %s880 = scalar_lea.vmem %s4, 5
    %v881 = vld [vmem:[%s880] ss:$8 sm:$0x3]
    %882 = vset.pattern.permute.xlu0 5
    %883 = vperm.xlu0 %882, %v774
    %v884 = vpop.permute.xlu0 %883
    %v887 = vlaneseq
    %v888 = vshrl.u32 %v887, 7
    %v889 = vsub.s32 0, %v888
    %v890 = vrot.slane %v881, %v889
    %v891 = vlaneseq
    %v892 = vshrl.u32 %v891, 7
    %v893 = vsub.s32 1, %v892
    %v894 = vrot.slane %v881, %v893
    %v897 = vmul.f32 %v884, %v890
    %v898 = vmul.f32 %v884, %v894
    %v899 = vadd.f32 %v878, %v897
    %v900 = vadd.f32 %v879, %v898
    %s901 = scalar_lea.vmem %s4, 6
    %v902 = vld [vmem:[%s901] ss:$8 sm:$0x3]
    %903 = vset.pattern.permute.xlu0 6
    %904 = vperm.xlu0 %903, %v774
    %v905 = vpop.permute.xlu0 %904
    %v908 = vlaneseq
    %v909 = vshrl.u32 %v908, 7
    %v910 = vsub.s32 0, %v909
    %v911 = vrot.slane %v902, %v910
    %v912 = vlaneseq
    %v913 = vshrl.u32 %v912, 7
    %v914 = vsub.s32 1, %v913
    %v915 = vrot.slane %v902, %v914
    %v918 = vmul.f32 %v905, %v911
    %v919 = vmul.f32 %v905, %v915
    %v920 = vadd.f32 %v899, %v918
    %v921 = vadd.f32 %v900, %v919
    %s922 = scalar_lea.vmem %s4, 7
    %v923 = vld [vmem:[%s922] ss:$8 sm:$0x3]
    %924 = vset.pattern.permute.xlu0 7
    %925 = vperm.xlu0 %924, %v774
    %v926 = vpop.permute.xlu0 %925
    %v929 = vlaneseq
    %v930 = vshrl.u32 %v929, 7
    %v931 = vsub.s32 0, %v930
    %v932 = vrot.slane %v923, %v931
    %v933 = vlaneseq
    %v934 = vshrl.u32 %v933, 7
    %v935 = vsub.s32 1, %v934
    %v936 = vrot.slane %v923, %v935
    %v939 = vmul.f32 %v926, %v932
    %v940 = vmul.f32 %v926, %v936
    %v941 = vadd.f32 %v920, %v939
    %v942 = vadd.f32 %v921, %v940
    %v943 = vmax.f32 %v941, 0.0
    %v944 = vmax.f32 %v942, 0.0
    %s945 = scalar_lea.vmem [#allocation5], 3
    %v946 = vld [vmem:[%s945] ss:$4 sm:$0x3]
    %v948 = vlaneseq
    %v949 = vshrl.u32 %v948, 7
    %v950 = vsub.s32 0, %v949
    %v951 = vrot.slane %v946, %v950
    %v952 = vlaneseq
    %v953 = vshrl.u32 %v952, 7
    %v954 = vsub.s32 1, %v953
    %v955 = vrot.slane %v946, %v954
    %v958 = vmul.f32 %v943, %v951
    %v959 = vmul.f32 %v944, %v955
    %v960 = vadd.f32 %v958, %v959
    %961 = vadd.xlane.f32.xlu0 %v960
    %v962 = vpop.xlane.xlu0 %961
    %s963 = sld [smem:[#allocation2]]
    %v964 = vstv %s963
    %v965 = vadd.f32 %v962, %v964
    %vm966 = vcmask 7168
    %967 = vst.msk [vmem:[%s8] sm:$0xff] %vm966, %v965
    // Predicated region
    $region42: #{critic_forward.3} parent=1 // pred_check
      _
    $region43: #{critic_forward.3} parent=1 // pred_check_branch
      %969 = sbr.rel (0) target = $region45
    $region44: #{critic_forward.3} parent=1 // pred_region
      _
    $region45: #{critic_forward.3} parent=1 // pred_fallthru
      _
    // Predicated region
    $region46: #{critic_forward.3} parent=1 // pred_check
      _
    $region47: #{critic_forward.3} parent=1 // pred_check_branch
      %971 = sbr.rel (0) target = $region49
    $region48: #{critic_forward.3} parent=1 // pred_region
      _
    $region49: #{critic_forward.3} parent=1 // pred_fallthru
      _
    %972 = vsyncpa [#allocation4], 1
    %973 = vsyncpa [#allocation6], 1

</llo_original>
